<compile_context>
chip_gen: v7x
topology: tpu7x:2x2x1
jax: 0.10.0
libtpu: 0.0.40
codegen_flags: <defaults>
</compile_context>

<pallas_src>
import jax
import jax.numpy as jnp
from jax.experimental import pallas as pl
from jax.experimental.pallas import tpu as pltpu


HIDDEN = 64  # fixed by the module definition


def _mlp_kernel(x_ref, w1_ref, b1_ref, w2_ref, b2_ref, w3_ref, b3_ref,
                wq_ref, bq_ref, o_ref):
    # All four matmuls + ReLUs fused in one kernel; weights/biases are VMEM
    # resident across the whole grid, only x/out tiles stream from HBM.
    x = x_ref[...]

    h = jnp.dot(x, w1_ref[...], preferred_element_type=jnp.float32) + b1_ref[...]
    h = jnp.maximum(h, 0.0)

    h = jnp.dot(h, w2_ref[...], preferred_element_type=jnp.float32) + b2_ref[...]
    h = jnp.maximum(h, 0.0)

    h = jnp.dot(h, w3_ref[...], preferred_element_type=jnp.float32) + b3_ref[...]
    h = jnp.maximum(h, 0.0)

    q = jnp.dot(h, wq_ref[...], preferred_element_type=jnp.float32) + bq_ref[...]
    o_ref[...] = q.astype(o_ref.dtype)


def _round_up(a, m):
    return (a + m - 1) // m * m


def state_action_value_residual(x, params, *, batch_tile=256):
    """Forward pass of StateActionValueResidual via a fused Pallas TPU kernel.

    x: [B, in_dim] float32 (bf16 also works; accumulation stays f32)
    params: dict with w1,b1,w2,b2,w3,b3,wq,bq (weights as [in, out], biases [1, out]).
    batch_tile: max rows per grid step (sweep 256..1024; multiple of 8).
    """
    B, in_dim = x.shape
    out_dim = params["wq"].shape[1]

    # Pick the row tile: <= batch_tile, multiple of 8, and prefer >= 2 grid
    # steps so the "parallel" axis can be split across v7x's two TensorCores.
    tile = min(batch_tile, max(8, _round_up(pl.cdiv(B, 2), 8)))

    # Pad the batch so it divides the tile; slice the result back afterwards.
    B_pad = _round_up(B, tile)
    if B_pad != B:
        x = jnp.pad(x, ((0, B_pad - B), (0, 0)))

    w1, b1 = params["w1"], params["b1"]
    w2, b2 = params["w2"], params["b2"]
    w3, b3 = params["w3"], params["b3"]
    wq, bq = params["wq"], params["bq"]

    grid = (B_pad // tile,)

    def full(shape):
        # full-array block, same block for every batch tile (stays resident)
        return pl.BlockSpec(shape, lambda i: tuple(0 for _ in shape))

    out = pl.pallas_call(
        _mlp_kernel,
        out_shape=jax.ShapeDtypeStruct((B_pad, out_dim), x.dtype),
        grid_spec=pltpu.PrefetchScalarGridSpec(
            num_scalar_prefetch=0,
            grid=grid,
            in_specs=[
                pl.BlockSpec((tile, in_dim), lambda i: (i, 0)),  # x tile
                full(w1.shape), full(b1.shape),
                full(w2.shape), full(b2.shape),
                full(w3.shape), full(b3.shape),
                full(wq.shape), full(bq.shape),
            ],
            out_specs=pl.BlockSpec((tile, out_dim), lambda i: (i, 0)),
        ),
        compiler_params=pltpu.CompilerParams(
            dimension_semantics=("parallel",),
            vmem_limit_bytes=32 * 1024 * 1024,
        ),
    )(x, w1, b1, w2, b2, w3, b3, wq, bq)

    return out[:B]


def init_params(key, in_dim, out_dim, hidden=HIDDEN, zero_q_init=True):
    """Init matching PyTorch nn.Linear defaults (U(-1/sqrt(fan_in), +)).
    q_out is zero-initialized by the module; set zero_q_init=False only for
    testing the full compute path."""
    def linear_init(k, fan_in, fan_out):
        kw, kb = jax.random.split(k)
        bound = 1.0 / jnp.sqrt(fan_in)
        w = jax.random.uniform(kw, (fan_in, fan_out), jnp.float32, -bound, bound)
        b = jax.random.uniform(kb, (1, fan_out), jnp.float32, -bound, bound)
        return w, b

    k1, k2, k3, k4 = jax.random.split(key, 4)
    w1, b1 = linear_init(k1, in_dim, hidden)
    w2, b2 = linear_init(k2, hidden, hidden)
    w3, b3 = linear_init(k3, hidden, hidden)
    if zero_q_init:
        wq = jnp.zeros((hidden, out_dim), jnp.float32)
        bq = jnp.zeros((1, out_dim), jnp.float32)
    else:
        wq, bq = linear_init(k4, hidden, out_dim)
    return dict(w1=w1, b1=b1, w2=w2, b2=b2, w3=w3, b3=b3, wq=wq, bq=bq)


def reference_forward(x, p):
    h = jnp.maximum(x @ p["w1"] + p["b1"], 0.0)
    h = jnp.maximum(h @ p["w2"] + p["b2"], 0.0)
    h = jnp.maximum(h @ p["w3"] + p["b3"], 0.0)
    return h @ p["wq"] + p["bq"]


if __name__ == "__main__":
    key = jax.random.PRNGKey(0)
    in_dim, out_dim = 32, 8

    kx, kx2, kp = jax.random.split(key, 3)
    # non-zero q_out so the test exercises the full compute path
    params = init_params(kp, in_dim, out_dim, zero_q_init=False)

    # small primary test: grid of 2 row-tiles
    x = jax.random.normal(kx, (16, in_dim), jnp.float32)
    q = jax.block_until_ready(state_action_value_residual(x, params))
    q_ref = reference_forward(x, params)
    assert q.shape == (16, out_dim)
    assert jnp.allclose(q, q_ref, atol=1e-5, rtol=1e-5)

    # ragged batch: exercises the pad-to-tile path
    x2 = jax.random.normal(kx2, (20, in_dim), jnp.float32)
    q2 = jax.block_until_ready(state_action_value_residual(x2, params))
    q2_ref = reference_forward(x2, params)
    assert q2.shape == (20, out_dim)
    assert jnp.allclose(q2, q2_ref, atol=1e-5, rtol=1e-5)

    print("KERNEL_OK")
</pallas_src>

<mosaic_0001>
module attributes {stable_mosaic.version = 11 : i64} {
  func.func @_mlp_kernel(%arg0: i32, %arg1: memref<8x32xf32, #tpu.memory_space<vmem>>, %arg2: memref<32x64xf32, #tpu.memory_space<vmem>>, %arg3: memref<1x64xf32, #tpu.memory_space<vmem>>, %arg4: memref<64x64xf32, #tpu.memory_space<vmem>>, %arg5: memref<1x64xf32, #tpu.memory_space<vmem>>, %arg6: memref<64x64xf32, #tpu.memory_space<vmem>>, %arg7: memref<1x64xf32, #tpu.memory_space<vmem>>, %arg8: memref<64x8xf32, #tpu.memory_space<vmem>>, %arg9: memref<1x8xf32, #tpu.memory_space<vmem>>, %arg10: memref<8x8xf32, #tpu.memory_space<vmem>>) attributes {dimension_semantics = [#tpu.dimension_semantics<parallel>], iteration_bounds = array<i64: 2>, scalar_prefetch = 0 : i64, scratch_operands = 0 : i64, tpu.core_type = #tpu.core_type<tc>, window_params = [{transform_indices = @transform_0, window_bounds = array<i64: 8, 32>}, {pipeline_mode = #tpu.pipeline_mode<synchronous>, transform_indices = @transform_1, window_bounds = array<i64: 32, 64>}, {pipeline_mode = #tpu.pipeline_mode<synchronous>, transform_indices = @transform_2, window_bounds = array<i64: 1, 64>}, {pipeline_mode = #tpu.pipeline_mode<synchronous>, transform_indices = @transform_3, window_bounds = array<i64: 64, 64>}, {pipeline_mode = #tpu.pipeline_mode<synchronous>, transform_indices = @transform_4, window_bounds = array<i64: 1, 64>}, {pipeline_mode = #tpu.pipeline_mode<synchronous>, transform_indices = @transform_5, window_bounds = array<i64: 64, 64>}, {pipeline_mode = #tpu.pipeline_mode<synchronous>, transform_indices = @transform_6, window_bounds = array<i64: 1, 64>}, {pipeline_mode = #tpu.pipeline_mode<synchronous>, transform_indices = @transform_7, window_bounds = array<i64: 64, 8>}, {pipeline_mode = #tpu.pipeline_mode<synchronous>, transform_indices = @transform_8, window_bounds = array<i64: 1, 8>}, {transform_indices = @transform_9, window_bounds = array<i64: 8, 8>}]} {
    %c0 = arith.constant 0 : index
    %c0_0 = arith.constant 0 : index
    %0 = vector.load %arg1[%c0, %c0_0] : memref<8x32xf32, #tpu.memory_space<vmem>>, vector<8x32xf32>
    %c0_1 = arith.constant 0 : index
    %c0_2 = arith.constant 0 : index
    %1 = vector.load %arg2[%c0_1, %c0_2] : memref<32x64xf32, #tpu.memory_space<vmem>>, vector<32x64xf32>
    %cst = arith.constant dense<0.000000e+00> : vector<8x64xf32>
    %2 = tpu.matmul %0, %1, %cst {dimension_numbers = #tpu.dot_dimension_numbers<[1], [0], [0], [1], [0, 0, 1, 1], [], []>} : vector<8x32xf32>, vector<32x64xf32>, vector<8x64xf32> -> vector<8x64xf32>
    %c0_3 = arith.constant 0 : index
    %c0_4 = arith.constant 0 : index
    %3 = vector.load %arg3[%c0_3, %c0_4] : memref<1x64xf32, #tpu.memory_space<vmem>>, vector<1x64xf32>
    %4 = vector.broadcast %3 : vector<1x64xf32> to vector<8x64xf32>
    %5 = arith.addf %2, %4 : vector<8x64xf32>
    %cst_5 = arith.constant 0.000000e+00 : f32
    %6 = vector.broadcast %cst_5 : f32 to vector<8x64xf32>
    %7 = arith.maximumf %5, %6 : vector<8x64xf32>
    %c0_6 = arith.constant 0 : index
    %c0_7 = arith.constant 0 : index
    %8 = vector.load %arg4[%c0_6, %c0_7] : memref<64x64xf32, #tpu.memory_space<vmem>>, vector<64x64xf32>
    %cst_8 = arith.constant dense<0.000000e+00> : vector<8x64xf32>
    %9 = tpu.matmul %7, %8, %cst_8 {dimension_numbers = #tpu.dot_dimension_numbers<[1], [0], [0], [1], [0, 0, 1, 1], [], []>} : vector<8x64xf32>, vector<64x64xf32>, vector<8x64xf32> -> vector<8x64xf32>
    %c0_9 = arith.constant 0 : index
    %c0_10 = arith.constant 0 : index
    %10 = vector.load %arg5[%c0_9, %c0_10] : memref<1x64xf32, #tpu.memory_space<vmem>>, vector<1x64xf32>
    %11 = vector.broadcast %10 : vector<1x64xf32> to vector<8x64xf32>
    %12 = arith.addf %9, %11 : vector<8x64xf32>
    %cst_11 = arith.constant 0.000000e+00 : f32
    %13 = vector.broadcast %cst_11 : f32 to vector<8x64xf32>
    %14 = arith.maximumf %12, %13 : vector<8x64xf32>
    %c0_12 = arith.constant 0 : index
    %c0_13 = arith.constant 0 : index
    %15 = vector.load %arg6[%c0_12, %c0_13] : memref<64x64xf32, #tpu.memory_space<vmem>>, vector<64x64xf32>
    %cst_14 = arith.constant dense<0.000000e+00> : vector<8x64xf32>
    %16 = tpu.matmul %14, %15, %cst_14 {dimension_numbers = #tpu.dot_dimension_numbers<[1], [0], [0], [1], [0, 0, 1, 1], [], []>} : vector<8x64xf32>, vector<64x64xf32>, vector<8x64xf32> -> vector<8x64xf32>
    %c0_15 = arith.constant 0 : index
    %c0_16 = arith.constant 0 : index
    %17 = vector.load %arg7[%c0_15, %c0_16] : memref<1x64xf32, #tpu.memory_space<vmem>>, vector<1x64xf32>
    %18 = vector.broadcast %17 : vector<1x64xf32> to vector<8x64xf32>
    %19 = arith.addf %16, %18 : vector<8x64xf32>
    %cst_17 = arith.constant 0.000000e+00 : f32
    %20 = vector.broadcast %cst_17 : f32 to vector<8x64xf32>
    %21 = arith.maximumf %19, %20 : vector<8x64xf32>
    %c0_18 = arith.constant 0 : index
    %c0_19 = arith.constant 0 : index
    %22 = vector.load %arg8[%c0_18, %c0_19] : memref<64x8xf32, #tpu.memory_space<vmem>>, vector<64x8xf32>
    %cst_20 = arith.constant dense<0.000000e+00> : vector<8x8xf32>
    %23 = tpu.matmul %21, %22, %cst_20 {dimension_numbers = #tpu.dot_dimension_numbers<[1], [0], [0], [1], [0, 0, 1, 1], [], []>} : vector<8x64xf32>, vector<64x8xf32>, vector<8x8xf32> -> vector<8x8xf32>
    %c0_21 = arith.constant 0 : index
    %c0_22 = arith.constant 0 : index
    %24 = vector.load %arg9[%c0_21, %c0_22] : memref<1x8xf32, #tpu.memory_space<vmem>>, vector<1x8xf32>
    %25 = vector.broadcast %24 : vector<1x8xf32> to vector<8x8xf32>
    %26 = arith.addf %23, %25 : vector<8x8xf32>
    %c0_23 = arith.constant 0 : index
    %c0_24 = arith.constant 0 : index
    %27 = vector.load %arg10[%c0_23, %c0_24] : memref<8x8xf32, #tpu.memory_space<vmem>>, vector<8x8xf32>
    tpu.vector_store %arg10[%c0_23, %c0_24], %26 {strides = array<i32>} : memref<8x8xf32, #tpu.memory_space<vmem>>, vector<8x8xf32>,
    return
  }
  func.func @transform_0(%arg0: i32) -> (i32, i32) {
    %c0_i32 = arith.constant 0 : i32
    %c0_i32_0 = arith.constant 0 : i32
    return %arg0, %c0_i32 : i32, i32
  }
  func.func @transform_1(%arg0: i32) -> (i32, i32) {
    %c0_i32 = arith.constant 0 : i32
    %c0_i32_0 = arith.constant 0 : i32
    %c0_i32_1 = arith.constant 0 : i32
    return %c0_i32, %c0_i32_0 : i32, i32
  }
  func.func @transform_2(%arg0: i32) -> (i32, i32) {
    %c0_i32 = arith.constant 0 : i32
    %c0_i32_0 = arith.constant 0 : i32
    %c0_i32_1 = arith.constant 0 : i32
    return %c0_i32, %c0_i32_0 : i32, i32
  }
  func.func @transform_3(%arg0: i32) -> (i32, i32) {
    %c0_i32 = arith.constant 0 : i32
    %c0_i32_0 = arith.constant 0 : i32
    %c0_i32_1 = arith.constant 0 : i32
    return %c0_i32, %c0_i32_0 : i32, i32
  }
  func.func @transform_4(%arg0: i32) -> (i32, i32) {
    %c0_i32 = arith.constant 0 : i32
    %c0_i32_0 = arith.constant 0 : i32
    %c0_i32_1 = arith.constant 0 : i32
    return %c0_i32, %c0_i32_0 : i32, i32
  }
  func.func @transform_5(%arg0: i32) -> (i32, i32) {
    %c0_i32 = arith.constant 0 : i32
    %c0_i32_0 = arith.constant 0 : i32
    %c0_i32_1 = arith.constant 0 : i32
    return %c0_i32, %c0_i32_0 : i32, i32
  }
  func.func @transform_6(%arg0: i32) -> (i32, i32) {
    %c0_i32 = arith.constant 0 : i32
    %c0_i32_0 = arith.constant 0 : i32
    %c0_i32_1 = arith.constant 0 : i32
    return %c0_i32, %c0_i32_0 : i32, i32
  }
  func.func @transform_7(%arg0: i32) -> (i32, i32) {
    %c0_i32 = arith.constant 0 : i32
    %c0_i32_0 = arith.constant 0 : i32
    %c0_i32_1 = arith.constant 0 : i32
    return %c0_i32, %c0_i32_0 : i32, i32
  }
  func.func @transform_8(%arg0: i32) -> (i32, i32) {
    %c0_i32 = arith.constant 0 : i32
    %c0_i32_0 = arith.constant 0 : i32
    %c0_i32_1 = arith.constant 0 : i32
    return %c0_i32, %c0_i32_0 : i32, i32
  }
  func.func @transform_9(%arg0: i32) -> (i32, i32) {
    %c0_i32 = arith.constant 0 : i32
    %c0_i32_0 = arith.constant 0 : i32
    return %arg0, %c0_i32 : i32, i32
  }
}

</mosaic_0001>

<llo_original>
// kernel: tpu_custom_call.1
$region0: #{tpu_custom_call.1}
  #allocation0 [shape = 'u32[]', space=smem, size = 0x4, offset = 0x4, fixed_abs, tag = 'smem constant byte address 0x4 - core index']
  #allocation1 [shape = 'u32[144,128]{1,0:T(1,128)}', space=vmem, size = 0x12000, scoped, tag = 'internal scratch']
  %s0 = inlined_call_operand.vmem [shape: f32[16,32], index: 0, kind: input, shape index: {}]
  %s1 = inlined_call_operand.hbm [shape: f32[32,64], index: 1, kind: input, shape index: {}]
  %s2 = inlined_call_operand.vmem [shape: f32[1,64], index: 2, kind: input, shape index: {}]
  %s3 = inlined_call_operand.vmem [shape: f32[64,64], index: 3, kind: input, shape index: {}]
  %s4 = inlined_call_operand.vmem [shape: f32[1,64], index: 4, kind: input, shape index: {}]
  %s5 = inlined_call_operand.hbm [shape: f32[64,64], index: 5, kind: input, shape index: {}]
  %s6 = inlined_call_operand.vmem [shape: f32[1,64], index: 6, kind: input, shape index: {}]
  %s7 = inlined_call_operand.vmem [shape: f32[64,8], index: 7, kind: input, shape index: {}]
  %s8 = inlined_call_operand.vmem [shape: f32[1,8], index: 8, kind: input, shape index: {}]
  %s9 = inlined_call_operand.vmem [shape: f32[16,8], index: 9, kind: output, shape index: {}]
  %s10 = sld [smem:[#allocation0]]
  $region77: #{tpu_custom_call.1} parent=0
    _
  %s12 = ssub.s32 1, %s10
  %s13 = scalar_select 0, %s12, %s10
  $region1: #{tpu_custom_call.1} parent=0
    #allocation2 [shape = 'u8[16384]{0}', space=vmem, size = 0x4000, scoped, tag = 'input window, operand 1, single buffered']
    #allocation3 [shape = 's32[2]{0}', space=sflag, size = 0x8, scoped, tag = 'scoped memory for tpu_custom_call.1']
    #allocation4 [shape = 'u8[32768]{0}', space=vmem, size = 0x8000, scoped, tag = 'input window, operand 5, single buffered']
    #allocation5 [shape = 's32[1]{0}', space=sflag, size = 0x4, scoped, tag = 'scoped memory for tpu_custom_call.1']
    %14 = vsyncpa [#allocation3], 0
    %15 = vsyncpa [#allocation5], 0
    loop: start=0, step=1, limit=4
    $region2: #{tpu_custom_call.1} parent=1 // loop_pre_header
      _
    $region3: #{tpu_custom_call.1} parent=1 // loop_header
      %s17 = sphi 0, %s21
      %p18 = scmp.ge.s32.totalorder %s17, 4
      %s27 = sphi 0, %s29
      %s30 = sphi 0, %s27
      %s31 = sphi 0, %s30
      %s47 = sphi 0, %s31
      %s51 = sphi 0, %s51
      %s53 = sphi 0, %s51
      %s54 = sphi 0, %s53
      %s68 = sphi 0, %s54
      %s72 = sphi 0, %s72
      %s74 = sphi 0, %s72
      %s75 = sphi 0, %s74
      %s89 = sphi 0, %s75
      %s93 = sphi 0, %s93
      %s95 = sphi 0, %s93
      %s96 = sphi 0, %s95
      %s110 = sphi 0, %s96
      %s114 = sphi 0, %s114
      %s116 = sphi 0, %s114
      %s117 = sphi 0, %s116
      %s131 = sphi 0, %s117
      %s135 = sphi 0, %s135
      %s137 = sphi 0, %s135
      %s138 = sphi 0, %s137
      %s152 = sphi 0, %s138
      %s156 = sphi 0, %s156
      %s158 = sphi 0, %s156
      %s159 = sphi 0, %s158
      %s173 = sphi 0, %s159
      %s177 = sphi 0, %s177
      %s179 = sphi 0, %s177
      %s180 = sphi 0, %s179
      %s194 = sphi 0, %s180
      %s198 = sphi 0, %s198
      %s200 = sphi 0, %s198
      %s201 = sphi 0, %s200
      %s215 = sphi 0, %s201
      %s221 = sphi 0, %s223
      %s224 = sphi 0, %s221
      %s225 = sphi 0, %s224
      %s241 = sphi 0, %s225
    $region4: #{tpu_custom_call.1} parent=1 // loop_header_branch
      %20 = sbr.rel (%p18) target = $region8
    $region5: #{tpu_custom_call.1} parent=1 // loop_body
      %s22 = ssub.s32 %s17, 1
      %s23 = ssub.s32 %s17, 2
      %s24 = sadd.s32 %s17, 1
      %s25 = ssub.s32 %s17, %s24
      %p26 = scmp.eq.s32.totalorder %s25, 0
      %s28 = sadd.s32 %s27, 1
      %s29 = scalar_select %p26, %s27, %s28
      %p32 = pneg %p26
      %p33 = scmp.eq.s32.totalorder %s17, 1
      %p34 = por %p32, %p33
      %p35 = scmp.ne.s32.totalorder %s27, %s30
      %p36 = scmp.eq.s32.totalorder %s17, 0
      %p37 = por %p35, %p36
      %p38 = scmp.ne.s32.totalorder %s27, %s30
      %p39 = scmp.eq.s32.totalorder %s22, 1
      %p40 = por %p38, %p39
      %p41 = scmp.ne.s32.totalorder %s30, %s31
      %p42 = scmp.eq.s32.totalorder %s22, 0
      %p43 = por %p41, %p42
      %p44 = scmp.ne.s32.totalorder %s30, %s31
      %p45 = scmp.eq.s32.totalorder %s23, 1
      %p46 = por %p44, %p45
      %p48 = scmp.ne.s32.totalorder %s31, %s47
      %p49 = scmp.eq.s32.totalorder %s23, 0
      %p50 = por %p48, %p49
      %s52 = sadd.s32 %s51, 1
      %p55 = scmp.eq.s32.totalorder %s17, 1
      %p56 = scmp.ne.s32.totalorder %s51, %s53
      %p57 = scmp.eq.s32.totalorder %s17, 0
      %p58 = por %p56, %p57
      %p59 = scmp.ne.s32.totalorder %s51, %s53
      %p60 = scmp.eq.s32.totalorder %s22, 1
      %p61 = por %p59, %p60
      %p62 = scmp.ne.s32.totalorder %s53, %s54
      %p63 = scmp.eq.s32.totalorder %s22, 0
      %p64 = por %p62, %p63
      %p65 = scmp.ne.s32.totalorder %s53, %s54
      %p66 = scmp.eq.s32.totalorder %s23, 1
      %p67 = por %p65, %p66
      %p69 = scmp.ne.s32.totalorder %s54, %s68
      %p70 = scmp.eq.s32.totalorder %s23, 0
      %p71 = por %p69, %p70
      %s73 = sadd.s32 %s72, 1
      %p76 = scmp.eq.s32.totalorder %s17, 1
      %p77 = scmp.ne.s32.totalorder %s72, %s74
      %p78 = scmp.eq.s32.totalorder %s17, 0
      %p79 = por %p77, %p78
      %p80 = scmp.ne.s32.totalorder %s72, %s74
      %p81 = scmp.eq.s32.totalorder %s22, 1
      %p82 = por %p80, %p81
      %p83 = scmp.ne.s32.totalorder %s74, %s75
      %p84 = scmp.eq.s32.totalorder %s22, 0
      %p85 = por %p83, %p84
      %p86 = scmp.ne.s32.totalorder %s74, %s75
      %p87 = scmp.eq.s32.totalorder %s23, 1
      %p88 = por %p86, %p87
      %p90 = scmp.ne.s32.totalorder %s75, %s89
      %p91 = scmp.eq.s32.totalorder %s23, 0
      %p92 = por %p90, %p91
      %s94 = sadd.s32 %s93, 1
      %p97 = scmp.eq.s32.totalorder %s17, 1
      %p98 = scmp.ne.s32.totalorder %s93, %s95
      %p99 = scmp.eq.s32.totalorder %s17, 0
      %p100 = por %p98, %p99
      %p101 = scmp.ne.s32.totalorder %s93, %s95
      %p102 = scmp.eq.s32.totalorder %s22, 1
      %p103 = por %p101, %p102
      %p104 = scmp.ne.s32.totalorder %s95, %s96
      %p105 = scmp.eq.s32.totalorder %s22, 0
      %p106 = por %p104, %p105
      %p107 = scmp.ne.s32.totalorder %s95, %s96
      %p108 = scmp.eq.s32.totalorder %s23, 1
      %p109 = por %p107, %p108
      %p111 = scmp.ne.s32.totalorder %s96, %s110
      %p112 = scmp.eq.s32.totalorder %s23, 0
      %p113 = por %p111, %p112
      %s115 = sadd.s32 %s114, 1
      %p118 = scmp.eq.s32.totalorder %s17, 1
      %p119 = scmp.ne.s32.totalorder %s114, %s116
      %p120 = scmp.eq.s32.totalorder %s17, 0
      %p121 = por %p119, %p120
      %p122 = scmp.ne.s32.totalorder %s114, %s116
      %p123 = scmp.eq.s32.totalorder %s22, 1
      %p124 = por %p122, %p123
      %p125 = scmp.ne.s32.totalorder %s116, %s117
      %p126 = scmp.eq.s32.totalorder %s22, 0
      %p127 = por %p125, %p126
      %p128 = scmp.ne.s32.totalorder %s116, %s117
      %p129 = scmp.eq.s32.totalorder %s23, 1
      %p130 = por %p128, %p129
      %p132 = scmp.ne.s32.totalorder %s117, %s131
      %p133 = scmp.eq.s32.totalorder %s23, 0
      %p134 = por %p132, %p133
      %s136 = sadd.s32 %s135, 1
      %p139 = scmp.eq.s32.totalorder %s17, 1
      %p140 = scmp.ne.s32.totalorder %s135, %s137
      %p141 = scmp.eq.s32.totalorder %s17, 0
      %p142 = por %p140, %p141
      %p143 = scmp.ne.s32.totalorder %s135, %s137
      %p144 = scmp.eq.s32.totalorder %s22, 1
      %p145 = por %p143, %p144
      %p146 = scmp.ne.s32.totalorder %s137, %s138
      %p147 = scmp.eq.s32.totalorder %s22, 0
      %p148 = por %p146, %p147
      %p149 = scmp.ne.s32.totalorder %s137, %s138
      %p150 = scmp.eq.s32.totalorder %s23, 1
      %p151 = por %p149, %p150
      %p153 = scmp.ne.s32.totalorder %s138, %s152
      %p154 = scmp.eq.s32.totalorder %s23, 0
      %p155 = por %p153, %p154
      %s157 = sadd.s32 %s156, 1
      %p160 = scmp.eq.s32.totalorder %s17, 1
      %p161 = scmp.ne.s32.totalorder %s156, %s158
      %p162 = scmp.eq.s32.totalorder %s17, 0
      %p163 = por %p161, %p162
      %p164 = scmp.ne.s32.totalorder %s156, %s158
      %p165 = scmp.eq.s32.totalorder %s22, 1
      %p166 = por %p164, %p165
      %p167 = scmp.ne.s32.totalorder %s158, %s159
      %p168 = scmp.eq.s32.totalorder %s22, 0
      %p169 = por %p167, %p168
      %p170 = scmp.ne.s32.totalorder %s158, %s159
      %p171 = scmp.eq.s32.totalorder %s23, 1
      %p172 = por %p170, %p171
      %p174 = scmp.ne.s32.totalorder %s159, %s173
      %p175 = scmp.eq.s32.totalorder %s23, 0
      %p176 = por %p174, %p175
      %s178 = sadd.s32 %s177, 1
      %p181 = scmp.eq.s32.totalorder %s17, 1
      %p182 = scmp.ne.s32.totalorder %s177, %s179
      %p183 = scmp.eq.s32.totalorder %s17, 0
      %p184 = por %p182, %p183
      %p185 = scmp.ne.s32.totalorder %s177, %s179
      %p186 = scmp.eq.s32.totalorder %s22, 1
      %p187 = por %p185, %p186
      %p188 = scmp.ne.s32.totalorder %s179, %s180
      %p189 = scmp.eq.s32.totalorder %s22, 0
      %p190 = por %p188, %p189
      %p191 = scmp.ne.s32.totalorder %s179, %s180
      %p192 = scmp.eq.s32.totalorder %s23, 1
      %p193 = por %p191, %p192
      %p195 = scmp.ne.s32.totalorder %s180, %s194
      %p196 = scmp.eq.s32.totalorder %s23, 0
      %p197 = por %p195, %p196
      %s199 = sadd.s32 %s198, 1
      %p202 = scmp.eq.s32.totalorder %s17, 1
      %p203 = scmp.ne.s32.totalorder %s198, %s200
      %p204 = scmp.eq.s32.totalorder %s17, 0
      %p205 = por %p203, %p204
      %p206 = scmp.ne.s32.totalorder %s198, %s200
      %p207 = scmp.eq.s32.totalorder %s22, 1
      %p208 = por %p206, %p207
      %p209 = scmp.ne.s32.totalorder %s200, %s201
      %p210 = scmp.eq.s32.totalorder %s22, 0
      %p211 = por %p209, %p210
      %p212 = scmp.ne.s32.totalorder %s200, %s201
      %p213 = scmp.eq.s32.totalorder %s23, 1
      %p214 = por %p212, %p213
      %p216 = scmp.ne.s32.totalorder %s201, %s215
      %p217 = scmp.eq.s32.totalorder %s23, 0
      %p218 = por %p216, %p217
      %s219 = ssub.s32 %s17, %s24
      %p220 = scmp.eq.s32.totalorder %s219, 0
      %s222 = sadd.s32 %s221, 1
      %s223 = scalar_select %p220, %s221, %s222
      %p226 = pneg %p220
      %p227 = scmp.eq.s32.totalorder %s17, 1
      %p228 = por %p226, %p227
      %p229 = scmp.ne.s32.totalorder %s221, %s224
      %p230 = scmp.eq.s32.totalorder %s17, 0
      %p231 = por %p229, %p230
      %p232 = scmp.ne.s32.totalorder %s221, %s224
      %p233 = scmp.eq.s32.totalorder %s22, 1
      %p234 = por %p232, %p233
      %p235 = scmp.ne.s32.totalorder %s224, %s225
      %p236 = scmp.eq.s32.totalorder %s22, 0
      %p237 = por %p235, %p236
      %p238 = scmp.ne.s32.totalorder %s224, %s225
      %p239 = scmp.eq.s32.totalorder %s23, 1
      %p240 = por %p238, %p239
      %p242 = scmp.ne.s32.totalorder %s225, %s241
      %p243 = scmp.eq.s32.totalorder %s23, 0
      %p244 = por %p242, %p243
      %p245 = scmp.le.s32.totalorder 1, %s17
      %p246 = scmp.lt.s32.totalorder %s17, 3
      %p247 = pnand %p245, %p246
      %p248 = pneg %p247
      // Predicated region
      $region9: #{tpu_custom_call.1} parent=5 // pred_check
        _
      $region10: #{tpu_custom_call.1} parent=5 // pred_check_branch
        %250 = sbr.rel (%p247) target = $region12
      $region11: #{tpu_custom_call.1} parent=5 // pred_region
        %s251 = ssub.s32 %s17, 1
        // Predicated region
        $region13: #{tpu_custom_call.1} parent=11 // pred_check
          %p252 = pneg %p64
        $region14: #{tpu_custom_call.1} parent=11 // pred_check_branch
          %254 = sbr.rel (%p252) target = $region16
        $region15: #{tpu_custom_call.1} parent=11 // pred_region
          %s256 = ssub.s32 512, 512
          %257 = vsyncadd [#allocation3], %s256
          %s258 = sshll.u32 [#allocation2], 4
          %s259 = int_to_ptr.vmem [resolvable:$true] %s258
          %264 = dma.hbm_to_vmem [thread:$0]  %s1, 512, %s259, [#allocation3], 128, 128, 8
        $region16: #{tpu_custom_call.1} parent=11 // pred_fallthru
          _
        // Predicated region
        $region17: #{tpu_custom_call.1} parent=11 // pred_check
          %p265 = pneg %p85
        $region18: #{tpu_custom_call.1} parent=11 // pred_check_branch
          %267 = sbr.rel (%p265) target = $region20
        $region19: #{tpu_custom_call.1} parent=11 // pred_region
          _
        $region20: #{tpu_custom_call.1} parent=11 // pred_fallthru
          _
        // Predicated region
        $region21: #{tpu_custom_call.1} parent=11 // pred_check
          %p268 = pneg %p106
        $region22: #{tpu_custom_call.1} parent=11 // pred_check_branch
          %270 = sbr.rel (%p268) target = $region24
        $region23: #{tpu_custom_call.1} parent=11 // pred_region
          _
        $region24: #{tpu_custom_call.1} parent=11 // pred_fallthru
          _
        // Predicated region
        $region25: #{tpu_custom_call.1} parent=11 // pred_check
          %p271 = pneg %p127
        $region26: #{tpu_custom_call.1} parent=11 // pred_check_branch
          %273 = sbr.rel (%p271) target = $region28
        $region27: #{tpu_custom_call.1} parent=11 // pred_region
          _
        $region28: #{tpu_custom_call.1} parent=11 // pred_fallthru
          _
        // Predicated region
        $region29: #{tpu_custom_call.1} parent=11 // pred_check
          %p274 = pneg %p148
        $region30: #{tpu_custom_call.1} parent=11 // pred_check_branch
          %276 = sbr.rel (%p274) target = $region32
        $region31: #{tpu_custom_call.1} parent=11 // pred_region
          %s278 = ssub.s32 1024, 1024
          %279 = vsyncadd [#allocation5], %s278
          %s280 = sshll.u32 [#allocation4], 4
          %s281 = int_to_ptr.vmem [resolvable:$true] %s280
          %286 = dma.hbm_to_vmem [thread:$0]  %s5, 1024, %s281, [#allocation5], 128, 128, 8
        $region32: #{tpu_custom_call.1} parent=11 // pred_fallthru
          _
        // Predicated region
        $region33: #{tpu_custom_call.1} parent=11 // pred_check
          %p287 = pneg %p169
        $region34: #{tpu_custom_call.1} parent=11 // pred_check_branch
          %289 = sbr.rel (%p287) target = $region36
        $region35: #{tpu_custom_call.1} parent=11 // pred_region
          _
        $region36: #{tpu_custom_call.1} parent=11 // pred_fallthru
          _
        // Predicated region
        $region37: #{tpu_custom_call.1} parent=11 // pred_check
          %p290 = pneg %p190
        $region38: #{tpu_custom_call.1} parent=11 // pred_check_branch
          %292 = sbr.rel (%p290) target = $region40
        $region39: #{tpu_custom_call.1} parent=11 // pred_region
          _
        $region40: #{tpu_custom_call.1} parent=11 // pred_fallthru
          _
        // Predicated region
        $region41: #{tpu_custom_call.1} parent=11 // pred_check
          %p293 = pneg %p211
        $region42: #{tpu_custom_call.1} parent=11 // pred_check_branch
          %295 = sbr.rel (%p293) target = $region44
        $region43: #{tpu_custom_call.1} parent=11 // pred_region
          _
        $region44: #{tpu_custom_call.1} parent=11 // pred_fallthru
          _
      $region12: #{tpu_custom_call.1} parent=5 // pred_fallthru
        _
      %p296 = scmp.lt.s32.totalorder %s17, 2
      // Predicated region
      $region45: #{tpu_custom_call.1} parent=5 // pred_check
        %p297 = pneg %p296
      $region46: #{tpu_custom_call.1} parent=5 // pred_check_branch
        %299 = sbr.rel (%p297) target = $region48
      $region47: #{tpu_custom_call.1} parent=5 // pred_region
        // Predicated region
        $region49: #{tpu_custom_call.1} parent=47 // pred_check
          %p300 = pneg %p37
        $region50: #{tpu_custom_call.1} parent=47 // pred_check_branch
          %302 = sbr.rel (%p300) target = $region52
        $region51: #{tpu_custom_call.1} parent=47 // pred_region
          %p303 = scmp.lt.s32.totalorder %s17, 1
          %s304 = scalar_select %p303, %s17, 1
          %s305 = smul.addr %s304, 8
          %s306 = scalar_lea.vmem %s0, %s305
        $region52: #{tpu_custom_call.1} parent=47 // pred_fallthru
          _
      $region48: #{tpu_custom_call.1} parent=5 // pred_fallthru
        _
      %p307 = scmp.le.s32.totalorder 1, %s17
      %p308 = scmp.lt.s32.totalorder %s17, 3
      %p309 = pnand %p307, %p308
      %p310 = pneg %p309
      // Predicated region
      $region53: #{tpu_custom_call.1} parent=5 // pred_check
        _
      $region54: #{tpu_custom_call.1} parent=5 // pred_check_branch
        %312 = sbr.rel (%p309) target = $region56
      $region55: #{tpu_custom_call.1} parent=5 // pred_region
        %s313 = ssub.s32 %s17, 1
        // Predicated region
        $region57: #{tpu_custom_call.1} parent=55 // pred_check
          %p314 = pneg %p64
        $region58: #{tpu_custom_call.1} parent=55 // pred_check_branch
          %316 = sbr.rel (%p314) target = $region60
        $region59: #{tpu_custom_call.1} parent=55 // pred_region
          %317 = dma.done [#allocation3], 512
        $region60: #{tpu_custom_call.1} parent=55 // pred_fallthru
          _
        // Predicated region
        $region61: #{tpu_custom_call.1} parent=55 // pred_check
          %p318 = pneg %p148
        $region62: #{tpu_custom_call.1} parent=55 // pred_check_branch
          %320 = sbr.rel (%p318) target = $region64
        $region63: #{tpu_custom_call.1} parent=55 // pred_region
          %321 = dma.done [#allocation5], 1024
        $region64: #{tpu_custom_call.1} parent=55 // pred_fallthru
          _
        %p322 = scmp.lt.s32.totalorder %s22, 1
        %s323 = scalar_select %p322, %s22, 1
        %s324 = smul.addr %s323, 8
        %s325 = scalar_lea.vmem %s0, %s324
        %p326 = pneg %p43
        %p327 = pneg %p40
        %p328 = pneg %p64
        %p329 = pneg %p61
        %p330 = pneg %p85
        %p331 = pneg %p82
        %p332 = pneg %p106
        %p333 = pneg %p103
        %p334 = pneg %p127
        %p335 = pneg %p124
        %p336 = pneg %p148
        %p337 = pneg %p145
        %p338 = pneg %p169
        %p339 = pneg %p166
        %p340 = pneg %p190
        %p341 = pneg %p187
        %p342 = pneg %p211
        %p343 = pneg %p208
        %p344 = pneg %p237
        %p345 = pneg %p234
        %p346 = scmp.lt.s32.totalorder %s22, 1
        %s347 = scalar_select %p346, %s22, 1
        %s348 = smul.addr %s347, 8
        %s349 = scalar_lea.vmem %s9, %s348
        %p350 = scmp.lt.s32.totalorder %s22, 1
        %s351 = scalar_select %p350, %s22, 1
        %s352 = smul.addr %s351, 8
        %s353 = scalar_lea.vmem %s0, %s352
        %p354 = scmp.lt.s32.totalorder %s22, 1
        %s355 = scalar_select %p354, %s22, 1
        %s356 = smul.addr %s355, 8
        %s357 = scalar_lea.vmem %s9, %s356
        %v358 = vld [vmem:[%s353] sm:$0xff]
        %v359 = vld [vmem:[#allocation2] sm:$0xff]
        %v360 = vld [vmem:[#allocation2 + $0x8] sm:$0xff]
        %v361 = vld [vmem:[#allocation2 + $0x10] sm:$0xff]
        %v362 = vld [vmem:[#allocation2 + $0x18] sm:$0xff]
        %v363 = vld [vmem:[%s2] sm:$0x1]
        %v365 = vlaneseq
        %v366 = vshrl.u32 %v365, 7
        %v367 = vsub.s32 0, %v366
        %v368 = vrot.slane %v363, %v367
        %vm370 = vcmask 261120
        %v372 = vsel %vm370, %v358, 0
        %374 = vmatprep.subr.mxu0 0.0
        %375 = vmatpush1.msra.mxu0 %v359
        %376 = vmatprep.subr.mxu0 0.0
        %377 = vmatpush1.msra.mxu0 %v360
        %378 = vmatprep.subr.mxu0 0.0
        %379 = vmatpush1.msra.mxu0 %v361
        %380 = vmatprep.subr.mxu0 0.0
        %381 = vmatpush1.msra.mxu0 %v362
        %382 = vmatprep.subr.mxu0 0.0
        %383 = vmatpush1.msra.mxu0 0.0
        %384 = vmatprep.subr.mxu0 0.0
        %385 = vmatpush1.msra.mxu0 0.0
        %386 = vmatprep.subr.mxu0 0.0
        %387 = vmatpush1.msra.mxu0 0.0
        %388 = vmatprep.subr.mxu0 0.0
        %389 = vmatpush1.msra.mxu0 0.0
        %390 = vmatprep.subr.mxu0 0.0
        %391 = vmatpush1.msra.mxu0 0.0
        %392 = vmatprep.subr.mxu0 0.0
        %393 = vmatpush1.msra.mxu0 0.0
        %394 = vmatprep.subr.mxu0 0.0
        %395 = vmatpush1.msra.mxu0 0.0
        %396 = vmatprep.subr.mxu0 0.0
        %397 = vmatpush1.msra.mxu0 0.0
        %398 = vmatprep.subr.mxu0 0.0
        %399 = vmatpush1.msra.mxu0 0.0
        %400 = vmatprep.subr.mxu0 0.0
        %401 = vmatpush1.msra.mxu0 0.0
        %402 = vmatprep.subr.mxu0 0.0
        %403 = vmatpush1.msra.mxu0 0.0
        %404 = vmatprep.subr.mxu0 0.0
        %405 = vmatpush1.msra.mxu0 0.0
        %406 = vmatprep.subr.mxu0 0.0
        %407 = vmatpush1.msra.mxu0 0.0
        %408 = vmatprep.subr.mxu0 0.0
        %409 = vmatpush1.msra.mxu0 0.0
        %410 = vmatprep.subr.mxu0 0.0
        %411 = vmatpush1.msra.mxu0 0.0
        %412 = vmatprep.subr.mxu0 0.0
        %413 = vmatpush1.msra.mxu0 0.0
        %414 = vmatprep.subr.mxu0 0.0
        %415 = vmatpush1.msra.mxu0 0.0
        %416 = vmatprep.subr.mxu0 0.0
        %417 = vmatpush1.msra.mxu0 0.0
        %418 = vmatprep.subr.mxu0 0.0
        %419 = vmatpush1.msra.mxu0 0.0
        %420 = vmatprep.subr.mxu0 0.0
        %421 = vmatpush1.msra.mxu0 0.0
        %422 = vmatprep.subr.mxu0 0.0
        %423 = vmatpush1.msra.mxu0 0.0
        %424 = vmatprep.subr.mxu0 0.0
        %425 = vmatpush1.msra.mxu0 0.0
        %426 = vmatprep.subr.mxu0 0.0
        %427 = vmatpush1.msra.mxu0 0.0
        %428 = vmatprep.subr.mxu0 0.0
        %429 = vmatpush1.msra.mxu0 0.0
        %430 = vmatprep.subr.mxu0 0.0
        %431 = vmatpush1.msra.mxu0 0.0
        %432 = vmatprep.subr.mxu0 0.0
        %433 = vmatpush1.msra.mxu0 0.0
        %434 = vmatprep.subr.mxu0 0.0
        %435 = vmatpush1.msra.mxu0 0.0
        %436 = vmatprep.subr.mxu0 0.0
        %437 = vmatpush1.msra.mxu0 0.0
        %438 = vmatprep.mubr.f32.mxu0 0.0
        %439 = vmatmul.mubr.f32.gmra.mrb[0].mxu0 %v372
        %v440 = vpop.f32.mrb[0].mxu0
        %v441 = vadd.f32 %v368, %v440
        %v442 = vpop.f32.mrb[0].mxu0
        %443 = vdwg.mxu0
        %v444 = vmax.f32 %v441, 0.0
        %v445 = vld [vmem:[%s3] sm:$0xff]
        %v446 = vld [vmem:[%s3 + $0x8] sm:$0xff]
        %v447 = vld [vmem:[%s3 + $0x10] sm:$0xff]
        %v448 = vld [vmem:[%s3 + $0x18] sm:$0xff]
        %v449 = vld [vmem:[%s3 + $0x20] sm:$0xff]
        %v450 = vld [vmem:[%s3 + $0x28] sm:$0xff]
        %v451 = vld [vmem:[%s3 + $0x30] sm:$0xff]
        %v452 = vld [vmem:[%s3 + $0x38] sm:$0xff]
        %v453 = vld [vmem:[%s4] sm:$0x1]
        %v455 = vlaneseq
        %v456 = vshrl.u32 %v455, 7
        %v457 = vsub.s32 0, %v456
        %v458 = vrot.slane %v453, %v457
        %vm460 = vcmask 523264
        %v462 = vsel %vm460, %v444, 0
        %464 = vmatprep.subr.mxu0 0.0
        %465 = vmatpush1.msra.mxu0 %v445
        %466 = vmatprep.subr.mxu0 0.0
        %467 = vmatpush1.msra.mxu0 %v446
        %468 = vmatprep.subr.mxu0 0.0
        %469 = vmatpush1.msra.mxu0 %v447
        %470 = vmatprep.subr.mxu0 0.0
        %471 = vmatpush1.msra.mxu0 %v448
        %472 = vmatprep.subr.mxu0 0.0
        %473 = vmatpush1.msra.mxu0 %v449
        %474 = vmatprep.subr.mxu0 0.0
        %475 = vmatpush1.msra.mxu0 %v450
        %476 = vmatprep.subr.mxu0 0.0
        %477 = vmatpush1.msra.mxu0 %v451
        %478 = vmatprep.subr.mxu0 0.0
        %479 = vmatpush1.msra.mxu0 %v452
        %480 = vmatprep.subr.mxu0 0.0
        %481 = vmatpush1.msra.mxu0 0.0
        %482 = vmatprep.subr.mxu0 0.0
        %483 = vmatpush1.msra.mxu0 0.0
        %484 = vmatprep.subr.mxu0 0.0
        %485 = vmatpush1.msra.mxu0 0.0
        %486 = vmatprep.subr.mxu0 0.0
        %487 = vmatpush1.msra.mxu0 0.0
        %488 = vmatprep.subr.mxu0 0.0
        %489 = vmatpush1.msra.mxu0 0.0
        %490 = vmatprep.subr.mxu0 0.0
        %491 = vmatpush1.msra.mxu0 0.0
        %492 = vmatprep.subr.mxu0 0.0
        %493 = vmatpush1.msra.mxu0 0.0
        %494 = vmatprep.subr.mxu0 0.0
        %495 = vmatpush1.msra.mxu0 0.0
        %496 = vmatprep.subr.mxu0 0.0
        %497 = vmatpush1.msra.mxu0 0.0
        %498 = vmatprep.subr.mxu0 0.0
        %499 = vmatpush1.msra.mxu0 0.0
        %500 = vmatprep.subr.mxu0 0.0
        %501 = vmatpush1.msra.mxu0 0.0
        %502 = vmatprep.subr.mxu0 0.0
        %503 = vmatpush1.msra.mxu0 0.0
        %504 = vmatprep.subr.mxu0 0.0
        %505 = vmatpush1.msra.mxu0 0.0
        %506 = vmatprep.subr.mxu0 0.0
        %507 = vmatpush1.msra.mxu0 0.0
        %508 = vmatprep.subr.mxu0 0.0
        %509 = vmatpush1.msra.mxu0 0.0
        %510 = vmatprep.subr.mxu0 0.0
        %511 = vmatpush1.msra.mxu0 0.0
        %512 = vmatprep.subr.mxu0 0.0
        %513 = vmatpush1.msra.mxu0 0.0
        %514 = vmatprep.subr.mxu0 0.0
        %515 = vmatpush1.msra.mxu0 0.0
        %516 = vmatprep.subr.mxu0 0.0
        %517 = vmatpush1.msra.mxu0 0.0
        %518 = vmatprep.subr.mxu0 0.0
        %519 = vmatpush1.msra.mxu0 0.0
        %520 = vmatprep.subr.mxu0 0.0
        %521 = vmatpush1.msra.mxu0 0.0
        %522 = vmatprep.subr.mxu0 0.0
        %523 = vmatpush1.msra.mxu0 0.0
        %524 = vmatprep.subr.mxu0 0.0
        %525 = vmatpush1.msra.mxu0 0.0
        %526 = vmatprep.subr.mxu0 0.0
        %527 = vmatpush1.msra.mxu0 0.0
        %528 = vmatprep.mubr.f32.mxu0 0.0
        %529 = vmatmul.mubr.f32.gmra.mrb[0].mxu0 %v462
        %v530 = vpop.f32.mrb[0].mxu0
        %v531 = vadd.f32 %v458, %v530
        %v532 = vpop.f32.mrb[0].mxu0
        %533 = vdwg.mxu0
        %v534 = vmax.f32 %v531, 0.0
        %v535 = vld [vmem:[#allocation4] sm:$0xff]
        %v536 = vld [vmem:[#allocation4 + $0x8] sm:$0xff]
        %v537 = vld [vmem:[#allocation4 + $0x10] sm:$0xff]
        %v538 = vld [vmem:[#allocation4 + $0x18] sm:$0xff]
        %v539 = vld [vmem:[#allocation4 + $0x20] sm:$0xff]
        %v540 = vld [vmem:[#allocation4 + $0x28] sm:$0xff]
        %v541 = vld [vmem:[#allocation4 + $0x30] sm:$0xff]
        %v542 = vld [vmem:[#allocation4 + $0x38] sm:$0xff]
        %v543 = vld [vmem:[%s6] sm:$0x1]
        %v545 = vlaneseq
        %v546 = vshrl.u32 %v545, 7
        %v547 = vsub.s32 0, %v546
        %v548 = vrot.slane %v543, %v547
        %v551 = vsel %vm460, %v534, 0
        %553 = vmatprep.subr.mxu0 0.0
        %554 = vmatpush1.msra.mxu0 %v535
        %555 = vmatprep.subr.mxu0 0.0
        %556 = vmatpush1.msra.mxu0 %v536
        %557 = vmatprep.subr.mxu0 0.0
        %558 = vmatpush1.msra.mxu0 %v537
        %559 = vmatprep.subr.mxu0 0.0
        %560 = vmatpush1.msra.mxu0 %v538
        %561 = vmatprep.subr.mxu0 0.0
        %562 = vmatpush1.msra.mxu0 %v539
        %563 = vmatprep.subr.mxu0 0.0
        %564 = vmatpush1.msra.mxu0 %v540
        %565 = vmatprep.subr.mxu0 0.0
        %566 = vmatpush1.msra.mxu0 %v541
        %567 = vmatprep.subr.mxu0 0.0
        %568 = vmatpush1.msra.mxu0 %v542
        %569 = vmatprep.subr.mxu0 0.0
        %570 = vmatpush1.msra.mxu0 0.0
        %571 = vmatprep.subr.mxu0 0.0
        %572 = vmatpush1.msra.mxu0 0.0
        %573 = vmatprep.subr.mxu0 0.0
        %574 = vmatpush1.msra.mxu0 0.0
        %575 = vmatprep.subr.mxu0 0.0
        %576 = vmatpush1.msra.mxu0 0.0
        %577 = vmatprep.subr.mxu0 0.0
        %578 = vmatpush1.msra.mxu0 0.0
        %579 = vmatprep.subr.mxu0 0.0
        %580 = vmatpush1.msra.mxu0 0.0
        %581 = vmatprep.subr.mxu0 0.0
        %582 = vmatpush1.msra.mxu0 0.0
        %583 = vmatprep.subr.mxu0 0.0
        %584 = vmatpush1.msra.mxu0 0.0
        %585 = vmatprep.subr.mxu0 0.0
        %586 = vmatpush1.msra.mxu0 0.0
        %587 = vmatprep.subr.mxu0 0.0
        %588 = vmatpush1.msra.mxu0 0.0
        %589 = vmatprep.subr.mxu0 0.0
        %590 = vmatpush1.msra.mxu0 0.0
        %591 = vmatprep.subr.mxu0 0.0
        %592 = vmatpush1.msra.mxu0 0.0
        %593 = vmatprep.subr.mxu0 0.0
        %594 = vmatpush1.msra.mxu0 0.0
        %595 = vmatprep.subr.mxu0 0.0
        %596 = vmatpush1.msra.mxu0 0.0
        %597 = vmatprep.subr.mxu0 0.0
        %598 = vmatpush1.msra.mxu0 0.0
        %599 = vmatprep.subr.mxu0 0.0
        %600 = vmatpush1.msra.mxu0 0.0
        %601 = vmatprep.subr.mxu0 0.0
        %602 = vmatpush1.msra.mxu0 0.0
        %603 = vmatprep.subr.mxu0 0.0
        %604 = vmatpush1.msra.mxu0 0.0
        %605 = vmatprep.subr.mxu0 0.0
        %606 = vmatpush1.msra.mxu0 0.0
        %607 = vmatprep.subr.mxu0 0.0
        %608 = vmatpush1.msra.mxu0 0.0
        %609 = vmatprep.subr.mxu0 0.0
        %610 = vmatpush1.msra.mxu0 0.0
        %611 = vmatprep.subr.mxu0 0.0
        %612 = vmatpush1.msra.mxu0 0.0
        %613 = vmatprep.subr.mxu0 0.0
        %614 = vmatpush1.msra.mxu0 0.0
        %615 = vmatprep.subr.mxu0 0.0
        %616 = vmatpush1.msra.mxu0 0.0
        %617 = vmatprep.mubr.f32.mxu0 0.0
        %618 = vmatmul.mubr.f32.gmra.mrb[0].mxu0 %v551
        %v619 = vpop.f32.mrb[0].mxu0
        %v620 = vadd.f32 %v548, %v619
        %v621 = vpop.f32.mrb[0].mxu0
        %622 = vdwg.mxu0
        %v623 = vmax.f32 %v620, 0.0
        %v624 = vld [vmem:[%s7] sm:$0xff]
        %v625 = vld [vmem:[%s7 + $0x8] sm:$0xff]
        %v626 = vld [vmem:[%s7 + $0x10] sm:$0xff]
        %v627 = vld [vmem:[%s7 + $0x18] sm:$0xff]
        %v628 = vld [vmem:[%s7 + $0x20] sm:$0xff]
        %v629 = vld [vmem:[%s7 + $0x28] sm:$0xff]
        %v630 = vld [vmem:[%s7 + $0x30] sm:$0xff]
        %v631 = vld [vmem:[%s7 + $0x38] sm:$0xff]
        %v632 = vld [vmem:[%s8] sm:$0x1]
        %v634 = vlaneseq
        %v635 = vshrl.u32 %v634, 7
        %v636 = vsub.s32 0, %v635
        %v637 = vrot.slane %v632, %v636
        %v640 = vsel %vm460, %v623, 0
        %642 = vmatprep.subr.mxu0 0.0
        %643 = vmatpush1.msra.mxu0 %v624
        %644 = vmatprep.subr.mxu0 0.0
        %645 = vmatpush1.msra.mxu0 %v625
        %646 = vmatprep.subr.mxu0 0.0
        %647 = vmatpush1.msra.mxu0 %v626
        %648 = vmatprep.subr.mxu0 0.0
        %649 = vmatpush1.msra.mxu0 %v627
        %650 = vmatprep.subr.mxu0 0.0
        %651 = vmatpush1.msra.mxu0 %v628
        %652 = vmatprep.subr.mxu0 0.0
        %653 = vmatpush1.msra.mxu0 %v629
        %654 = vmatprep.subr.mxu0 0.0
        %655 = vmatpush1.msra.mxu0 %v630
        %656 = vmatprep.subr.mxu0 0.0
        %657 = vmatpush1.msra.mxu0 %v631
        %658 = vmatprep.subr.mxu0 0.0
        %659 = vmatpush1.msra.mxu0 0.0
        %660 = vmatprep.subr.mxu0 0.0
        %661 = vmatpush1.msra.mxu0 0.0
        %662 = vmatprep.subr.mxu0 0.0
        %663 = vmatpush1.msra.mxu0 0.0
        %664 = vmatprep.subr.mxu0 0.0
        %665 = vmatpush1.msra.mxu0 0.0
        %666 = vmatprep.subr.mxu0 0.0
        %667 = vmatpush1.msra.mxu0 0.0
        %668 = vmatprep.subr.mxu0 0.0
        %669 = vmatpush1.msra.mxu0 0.0
        %670 = vmatprep.subr.mxu0 0.0
        %671 = vmatpush1.msra.mxu0 0.0
        %672 = vmatprep.subr.mxu0 0.0
        %673 = vmatpush1.msra.mxu0 0.0
        %674 = vmatprep.subr.mxu0 0.0
        %675 = vmatpush1.msra.mxu0 0.0
        %676 = vmatprep.subr.mxu0 0.0
        %677 = vmatpush1.msra.mxu0 0.0
        %678 = vmatprep.subr.mxu0 0.0
        %679 = vmatpush1.msra.mxu0 0.0
        %680 = vmatprep.subr.mxu0 0.0
        %681 = vmatpush1.msra.mxu0 0.0
        %682 = vmatprep.subr.mxu0 0.0
        %683 = vmatpush1.msra.mxu0 0.0
        %684 = vmatprep.subr.mxu0 0.0
        %685 = vmatpush1.msra.mxu0 0.0
        %686 = vmatprep.subr.mxu0 0.0
        %687 = vmatpush1.msra.mxu0 0.0
        %688 = vmatprep.subr.mxu0 0.0
        %689 = vmatpush1.msra.mxu0 0.0
        %690 = vmatprep.subr.mxu0 0.0
        %691 = vmatpush1.msra.mxu0 0.0
        %692 = vmatprep.subr.mxu0 0.0
        %693 = vmatpush1.msra.mxu0 0.0
        %694 = vmatprep.subr.mxu0 0.0
        %695 = vmatpush1.msra.mxu0 0.0
        %696 = vmatprep.subr.mxu0 0.0
        %697 = vmatpush1.msra.mxu0 0.0
        %698 = vmatprep.subr.mxu0 0.0
        %699 = vmatpush1.msra.mxu0 0.0
        %700 = vmatprep.subr.mxu0 0.0
        %701 = vmatpush1.msra.mxu0 0.0
        %702 = vmatprep.subr.mxu0 0.0
        %703 = vmatpush1.msra.mxu0 0.0
        %704 = vmatprep.subr.mxu0 0.0
        %705 = vmatpush1.msra.mxu0 0.0
        %706 = vmatprep.mubr.f32.mxu0 0.0
        %707 = vmatmul.mubr.f32.gmra.mrb[0].mxu0 %v640
        %v708 = vpop.f32.mrb[0].mxu0
        %v709 = vadd.f32 %v637, %v708
        %v710 = vpop.f32.mrb[0].mxu0
        %711 = vdwg.mxu0
        %vm712 = vcmask 64512
        %713 = vst.msk [vmem:[%s357] sm:$0xff] %vm712, %v709
        %p714 = scmp.lt.s32.totalorder %s22, 1
        %s715 = scalar_select %p714, %s22, 1
        %s716 = smul.addr %s715, 8
        %s717 = scalar_lea.vmem %s9, %s716
        // Predicated region
        $region65: #{tpu_custom_call.1} parent=55 // pred_check
          %p718 = pneg %p234
        $region66: #{tpu_custom_call.1} parent=55 // pred_check_branch
          %720 = sbr.rel (%p718) target = $region68
        $region67: #{tpu_custom_call.1} parent=55 // pred_region
          _
        $region68: #{tpu_custom_call.1} parent=55 // pred_fallthru
          _
      $region56: #{tpu_custom_call.1} parent=5 // pred_fallthru
        _
      %p721 = scmp.le.s32.totalorder 2, %s17
      // Predicated region
      $region69: #{tpu_custom_call.1} parent=5 // pred_check
        %p722 = pneg %p721
      $region70: #{tpu_custom_call.1} parent=5 // pred_check_branch
        %724 = sbr.rel (%p722) target = $region72
      $region71: #{tpu_custom_call.1} parent=5 // pred_region
        %s725 = ssub.s32 %s17, 2
        // Predicated region
        $region73: #{tpu_custom_call.1} parent=71 // pred_check
          %p726 = pneg %p240
        $region74: #{tpu_custom_call.1} parent=71 // pred_check_branch
          %728 = sbr.rel (%p726) target = $region76
        $region75: #{tpu_custom_call.1} parent=71 // pred_region
          %p729 = scmp.lt.s32.totalorder %s23, 1
          %s730 = scalar_select %p729, %s23, 1
          %s731 = smul.addr %s730, 8
          %s732 = scalar_lea.vmem %s9, %s731
        $region76: #{tpu_custom_call.1} parent=71 // pred_fallthru
          _
      $region72: #{tpu_custom_call.1} parent=5 // pred_fallthru
        _
    $region6: #{tpu_custom_call.1} parent=1 // loop_footer
      %s21 = sadd.s32 1, %s17
    $region7: #{tpu_custom_call.1} parent=1 // loop_footer_branch
      %16 = sbr.rel target = $region3
    $region8: #{tpu_custom_call.1} parent=1 // loop_exit
      _
    %733 = vsyncpa [#allocation3], 1
    %s734 = scalar_lea.sflag [#allocation3], 1
    %735 = vsyncpa %s734, 1
    %736 = vsyncpa [#allocation5], 1

</llo_original>
